<compile_context>
chip_gen: v7x
topology: tpu7x:2x2x1
jax: 0.10.0
libtpu: 0.0.40
codegen_flags: <defaults>
</compile_context>

<pallas_src>
import functools

import jax
import jax.numpy as jnp
from jax.experimental import pallas as pl
from jax.experimental.pallas import tpu as pltpu


def _linear_clamp_kernel(x_ref, w_ref, o_ref, *, min_value, max_value, k_dim):
    # x_ref: (tb, K)    raw input rows (no augmentation)
    # w_ref: (K+1, N)   rows 0..K-1 = W^T, row K = bias
    # o_ref: (tb, N)
    tb = o_ref.shape[0]
    n = o_ref.shape[1]
    # Accumulator starts as the broadcast bias row (one sublane broadcast),
    # then an unrolled VPU multiply-add over the K=3 contraction.
    y = jnp.broadcast_to(w_ref[k_dim:k_dim + 1, :], (tb, n))
    for k in range(k_dim):
        y = y + x_ref[:, k:k + 1] * w_ref[k:k + 1, :]
    y = jnp.maximum(y, min_value)   # clamp_min
    y = jnp.minimum(y, max_value)   # clamp_max
    o_ref[...] = y.astype(o_ref.dtype)


def linear_clamp(x, w, b, *, min_value, max_value, block_b=8192):
    """y = clamp(x @ w.T + b, min_value, max_value).

    x: (B, K) f32, w: (N, K) f32 (PyTorch Linear layout), b: (N,) f32.
    """
    B, K = x.shape
    N, K2 = w.shape
    assert K == K2 and b.shape == (N,)

    # Bias folded into the tiny parameter table (16 floats) instead of into x.
    w_aug = jnp.concatenate(
        [w.T.astype(x.dtype), b.reshape(1, N).astype(x.dtype)], axis=0)  # (K+1, N)

    tb = min(block_b, B)
    grid = (pl.cdiv(B, tb),)

    kernel = functools.partial(
        _linear_clamp_kernel, min_value=min_value, max_value=max_value, k_dim=K)

    # Real traffic: x once, params once, y once (advisory scheduling hint).
    cost = pl.CostEstimate(
        flops=2 * B * K * N + 2 * B * N,
        transcendentals=0,
        bytes_accessed=4 * (B * K + (K + 1) * N + B * N),
    )

    return pl.pallas_call(
        kernel,
        out_shape=jax.ShapeDtypeStruct((B, N), jnp.float32),
        grid=grid,
        in_specs=[
            pl.BlockSpec((tb, K), lambda i: (i, 0)),
            # Constant index_map: the parameter table block index never changes,
            # so Pallas fetches it once rather than per grid step.
            pl.BlockSpec((K + 1, N), lambda i: (0, 0)),
        ],
        out_specs=pl.BlockSpec((tb, N), lambda i: (i, 0)),
        compiler_params=pltpu.CompilerParams(
            # Batch axis is embarrassingly parallel.
            # TODO(synk): on v7x, CORE_PARALLEL / an explicit per-core leading
            # axis could split HBM traffic across both TensorCores.
            dimension_semantics=("parallel",),
            # (tb,3)+(tb,4) f32 blocks are lane-padded in VMEM (~512 B/row
            # each); double-buffered => ~2 KiB/row.  tb=8192 => ~16 MiB, within
            # this limit and within v7x's 64 MiB physical VMEM.
            vmem_limit_bytes=32 * 1024 * 1024,
        ),
        cost_estimate=cost,
    )(x, w_aug)


if __name__ == "__main__":
    key = jax.random.PRNGKey(0)
    k_x, k_w, k_b, k_xb = jax.random.split(key, 4)

    # Module shapes: Linear(in_features=3, out_features=4), input x1: (1, 3).
    B, IN, OUT = 1, 3, 4
    min_value, max_value = -0.5, 0.5

    x1 = jax.random.normal(k_x, (B, IN), dtype=jnp.float32)
    # Deterministic synthetic parameters (PyTorch stores weight as (OUT, IN)).
    w = jax.random.normal(k_w, (OUT, IN), dtype=jnp.float32) * 0.1
    b = jax.random.normal(k_b, (OUT,), dtype=jnp.float32) * 0.1

    out = linear_clamp(x1, w, b, min_value=min_value, max_value=max_value)
    out = jax.block_until_ready(out)

    # Pure-JAX reference check (clamp_min then clamp_max == clip for min<max).
    ref = jnp.clip(x1 @ w.T + b, min_value, max_value)
    assert out.shape == (B, OUT)
    assert jnp.allclose(out, ref, atol=1e-5, rtol=1e-5), (out, ref)

    # Batched path: exercises the grid and the "parallel" batch axis.
    Bb = 4096
    xb = jax.random.normal(k_xb, (Bb, IN), dtype=jnp.float32)
    outb = linear_clamp(xb, w, b, min_value=min_value, max_value=max_value,
                        block_b=1024)
    outb = jax.block_until_ready(outb)
    refb = jnp.clip(xb @ w.T + b, min_value, max_value)
    assert outb.shape == (Bb, OUT)
    assert jnp.allclose(outb, refb, atol=1e-5, rtol=1e-5)

    print("KERNEL_OK")
</pallas_src>

<mosaic_0001>
module attributes {stable_mosaic.version = 11 : i64} {
  func.func @_linear_clamp_kernel(%arg0: i32, %arg1: memref<1x3xf32, #tpu.memory_space<vmem>>, %arg2: memref<4x4xf32, #tpu.memory_space<vmem>>, %arg3: memref<1x4xf32, #tpu.memory_space<vmem>>) attributes {dimension_semantics = [#tpu.dimension_semantics<parallel>], iteration_bounds = array<i64: 1>, scalar_prefetch = 0 : i64, scratch_operands = 0 : i64, tpu.core_type = #tpu.core_type<tc>, window_params = [{transform_indices = @transform_0, window_bounds = array<i64: 1, 3>}, {pipeline_mode = #tpu.pipeline_mode<synchronous>, transform_indices = @transform_1, window_bounds = array<i64: 4, 4>}, {transform_indices = @transform_2, window_bounds = array<i64: 1, 4>}]} {
    %c3 = arith.constant 3 : index
    %c0 = arith.constant 0 : index
    %0 = vector.load %arg2[%c3, %c0] : memref<4x4xf32, #tpu.memory_space<vmem>>, vector<1x4xf32>
    %c0_0 = arith.constant 0 : index
    %c0_1 = arith.constant 0 : index
    %1 = vector.load %arg1[%c0_0, %c0_1] : memref<1x3xf32, #tpu.memory_space<vmem>>, vector<1x1xf32>
    %c0_2 = arith.constant 0 : index
    %c0_3 = arith.constant 0 : index
    %2 = vector.load %arg2[%c0_2, %c0_3] : memref<4x4xf32, #tpu.memory_space<vmem>>, vector<1x4xf32>
    %3 = vector.broadcast %1 : vector<1x1xf32> to vector<1x4xf32>
    %4 = arith.mulf %3, %2 : vector<1x4xf32>
    %5 = arith.addf %0, %4 : vector<1x4xf32>
    %c0_4 = arith.constant 0 : index
    %c1 = arith.constant 1 : index
    %6 = vector.load %arg1[%c0_4, %c1] : memref<1x3xf32, #tpu.memory_space<vmem>>, vector<1x1xf32>
    %c1_5 = arith.constant 1 : index
    %c0_6 = arith.constant 0 : index
    %7 = vector.load %arg2[%c1_5, %c0_6] : memref<4x4xf32, #tpu.memory_space<vmem>>, vector<1x4xf32>
    %8 = vector.broadcast %6 : vector<1x1xf32> to vector<1x4xf32>
    %9 = arith.mulf %8, %7 : vector<1x4xf32>
    %10 = arith.addf %5, %9 : vector<1x4xf32>
    %c0_7 = arith.constant 0 : index
    %c2 = arith.constant 2 : index
    %11 = vector.load %arg1[%c0_7, %c2] : memref<1x3xf32, #tpu.memory_space<vmem>>, vector<1x1xf32>
    %c2_8 = arith.constant 2 : index
    %c0_9 = arith.constant 0 : index
    %12 = vector.load %arg2[%c2_8, %c0_9] : memref<4x4xf32, #tpu.memory_space<vmem>>, vector<1x4xf32>
    %13 = vector.broadcast %11 : vector<1x1xf32> to vector<1x4xf32>
    %14 = arith.mulf %13, %12 : vector<1x4xf32>
    %15 = arith.addf %10, %14 : vector<1x4xf32>
    %cst = arith.constant -5.000000e-01 : f32
    %16 = vector.broadcast %cst : f32 to vector<1x4xf32>
    %17 = arith.maximumf %15, %16 : vector<1x4xf32>
    %cst_10 = arith.constant 5.000000e-01 : f32
    %18 = vector.broadcast %cst_10 : f32 to vector<1x4xf32>
    %19 = arith.minimumf %17, %18 : vector<1x4xf32>
    %c0_11 = arith.constant 0 : index
    %c0_12 = arith.constant 0 : index
    %20 = vector.load %arg3[%c0_11, %c0_12] : memref<1x4xf32, #tpu.memory_space<vmem>>, vector<1x4xf32>
    tpu.vector_store %arg3[%c0_11, %c0_12], %19 {strides = array<i32>} : memref<1x4xf32, #tpu.memory_space<vmem>>, vector<1x4xf32>,
    return
  }
  func.func @transform_0(%arg0: i32) -> (i32, i32) {
    %c0_i32 = arith.constant 0 : i32
    %c0_i32_0 = arith.constant 0 : i32
    return %arg0, %c0_i32 : i32, i32
  }
  func.func @transform_1(%arg0: i32) -> (i32, i32) {
    %c0_i32 = arith.constant 0 : i32
    %c0_i32_0 = arith.constant 0 : i32
    %c0_i32_1 = arith.constant 0 : i32
    return %c0_i32, %c0_i32_0 : i32, i32
  }
  func.func @transform_2(%arg0: i32) -> (i32, i32) {
    %c0_i32 = arith.constant 0 : i32
    %c0_i32_0 = arith.constant 0 : i32
    return %arg0, %c0_i32 : i32, i32
  }
}

</mosaic_0001>

<llo_original>
// kernel: tpu_custom_call.1
$region0: #{tpu_custom_call.1}
  #allocation0 [shape = 'u32[]', space=smem, size = 0x4, offset = 0x4, fixed_abs, tag = 'smem constant byte address 0x4 - core index']
  #allocation1 [shape = 'u32[144,128]{1,0:T(1,128)}', space=vmem, size = 0x12000, scoped, tag = 'internal scratch']
  %s0 = inlined_call_operand.hbm [shape: f32[1,3], index: 0, kind: input, shape index: {}]
  %s1 = inlined_call_operand.hbm [shape: f32[4,4], index: 1, kind: input, shape index: {}]
  %s2 = inlined_call_operand.hbm [shape: f32[1,4], index: 2, kind: output, shape index: {}]
  %s3 = sld [smem:[#allocation0]]
  $region26: #{tpu_custom_call.1} parent=0
    _
  %s5 = ssub.s32 1, %s3
  %s6 = scalar_select 0, %s5, %s3
  $region1: #{tpu_custom_call.1} parent=0
    #allocation2 [shape = 'u8[512]{0}', space=vmem, size = 0x400, scoped, tag = 'input window, operand 0, single buffered']
    #allocation3 [shape = 's32[1]{0}', space=sflag, size = 0x4, scoped, tag = 'scoped memory for tpu_custom_call.1']
    #allocation4 [shape = 's32[1]{0}', space=sflag, size = 0x4, scoped, tag = 'scoped memory for tpu_custom_call.1']
    #allocation5 [shape = 'u8[2048]{0}', space=vmem, size = 0x800, scoped, tag = 'input window, operand 1, single buffered']
    #allocation6 [shape = 's32[1]{0}', space=sflag, size = 0x4, scoped, tag = 'scoped memory for tpu_custom_call.1']
    #allocation7 [shape = 'u8[512]{0}', space=vmem, size = 0x400, scoped, tag = 'output window, operand 0, single buffered']
    %7 = vsyncpa [#allocation3], 0
    %8 = vsyncpa [#allocation6], 0
    %9 = vsyncpa [#allocation4], 0
    // Predicated region
    $region2: #{tpu_custom_call.1} parent=1 // pred_check
      _
    $region3: #{tpu_custom_call.1} parent=1 // pred_check_branch
      %11 = sbr.rel (0) target = $region5
    $region4: #{tpu_custom_call.1} parent=1 // pred_region
      %s13 = ssub.s32 16, 16
      %14 = vsyncadd [#allocation3], %s13
      %s16 = sshll.u32 [#allocation2], 4
      %s17 = int_to_ptr.vmem [resolvable:$true] %s16
      %19 = dma.hbm_to_vmem [thread:$0]  %s0, 16, %s17, [#allocation3]
    $region5: #{tpu_custom_call.1} parent=1 // pred_fallthru
      _
    // Predicated region
    $region6: #{tpu_custom_call.1} parent=1 // pred_check
      _
    $region7: #{tpu_custom_call.1} parent=1 // pred_check_branch
      %21 = sbr.rel (0) target = $region9
    $region8: #{tpu_custom_call.1} parent=1 // pred_region
      %s23 = ssub.s32 64, 64
      %24 = vsyncadd [#allocation6], %s23
      %s26 = sshll.u32 [#allocation5], 4
      %s27 = int_to_ptr.vmem [resolvable:$true] %s26
      %29 = dma.hbm_to_vmem [thread:$0]  %s1, 64, %s27, [#allocation6]
    $region9: #{tpu_custom_call.1} parent=1 // pred_fallthru
      _
    // Predicated region
    $region10: #{tpu_custom_call.1} parent=1 // pred_check
      _
    $region11: #{tpu_custom_call.1} parent=1 // pred_check_branch
      %31 = sbr.rel (0) target = $region13
    $region12: #{tpu_custom_call.1} parent=1 // pred_region
      %32 = dma.done [#allocation3], 16
    $region13: #{tpu_custom_call.1} parent=1 // pred_fallthru
      _
    // Predicated region
    $region14: #{tpu_custom_call.1} parent=1 // pred_check
      _
    $region15: #{tpu_custom_call.1} parent=1 // pred_check_branch
      %34 = sbr.rel (0) target = $region17
    $region16: #{tpu_custom_call.1} parent=1 // pred_region
      %35 = dma.done [#allocation6], 64
    $region17: #{tpu_custom_call.1} parent=1 // pred_fallthru
      _
    %v36 = vld [vmem:[#allocation5 + $0x3] sm:$0x1]
    %v37 = vld [vmem:[#allocation2] sm:$0x1]
    %v38 = vld [vmem:[#allocation5] sm:$0x1]
    %40 = vset.pattern.permute.xlu0 0
    %41 = vperm.xlu0 %40, %v37
    %v42 = vpop.permute.xlu0 %41
    %v44 = vlaneseq
    %v45 = vshrl.u32 %v44, 7
    %v46 = vsub.s32 0, %v45
    %v47 = vrot.slane %v42, %v46
    %v48 = vmul.f32 %v47, %v38
    %v49 = vadd.f32 %v36, %v48
    %v50 = vld [vmem:[#allocation5 + $0x1] sm:$0x1]
    %51 = vset.pattern.permute.xlu0 1
    %52 = vperm.xlu0 %51, %v37
    %v53 = vpop.permute.xlu0 %52
    %v55 = vlaneseq
    %v56 = vshrl.u32 %v55, 7
    %v57 = vsub.s32 0, %v56
    %v58 = vrot.slane %v53, %v57
    %v59 = vmul.f32 %v58, %v50
    %v60 = vadd.f32 %v49, %v59
    %v61 = vld [vmem:[#allocation5 + $0x2] sm:$0x1]
    %62 = vset.pattern.permute.xlu0 2
    %63 = vperm.xlu0 %62, %v37
    %v64 = vpop.permute.xlu0 %63
    %v66 = vlaneseq
    %v67 = vshrl.u32 %v66, 7
    %v68 = vsub.s32 0, %v67
    %v69 = vrot.slane %v64, %v68
    %v70 = vmul.f32 %v69, %v61
    %v71 = vadd.f32 %v60, %v70
    %v72 = vmax.f32 %v71, -0.5
    %v73 = vmin.f32 %v72, 0.5
    %vm74 = vcmask 24576
    %75 = vst.msk [vmem:[#allocation7] sm:$0x1] %vm74, %v73
    // Predicated region
    $region18: #{tpu_custom_call.1} parent=1 // pred_check
      _
    $region19: #{tpu_custom_call.1} parent=1 // pred_check_branch
      %77 = sbr.rel (0) target = $region21
    $region20: #{tpu_custom_call.1} parent=1 // pred_region
      %s79 = ssub.s32 16, 16
      %80 = vsyncadd [#allocation4], %s79
      %s82 = sshll.u32 [#allocation7], 4
      %s83 = int_to_ptr.vmem [resolvable:$true] %s82
      %85 = dma.vmem_to_hbm [thread:$0]  %s83, 16, %s2, [#allocation4]
    $region21: #{tpu_custom_call.1} parent=1 // pred_fallthru
      _
    // Predicated region
    $region22: #{tpu_custom_call.1} parent=1 // pred_check
      _
    $region23: #{tpu_custom_call.1} parent=1 // pred_check_branch
      %87 = sbr.rel (0) target = $region25
    $region24: #{tpu_custom_call.1} parent=1 // pred_region
      %88 = dma.done [#allocation4], 16
    $region25: #{tpu_custom_call.1} parent=1 // pred_fallthru
      _
    %89 = vsyncpa [#allocation3], 1
    %90 = vsyncpa [#allocation6], 1
    %91 = vsyncpa [#allocation4], 1

</llo_original>
